<compile_context>
chip_gen: v6e
topology: v6e:2x2x1
jax: 0.10.0
libtpu: 0.0.40
codegen_flags: <defaults>
</compile_context>

<pallas_src>
import functools

import jax
import jax.numpy as jnp
from jax import lax
from jax.experimental import pallas as pl
from jax.experimental.pallas import tpu as pltpu


def _cosine_kernel(x_ref, w_ref, xinv_ref, winv_ref, b_ref, o_ref):
    """One (TB, TO) output tile.

    x_ref:    (TB, D)   raw input tile    (fed straight to the MXU)
    w_ref:    (TO, D)   raw weight tile   (fed straight to the MXU, no XLU transpose)
    xinv_ref: (TB, 1)   f32 per-row 1/max(||x_row||, eps)
    winv_ref: (1, TO)   f32 per-row 1/max(||w_row||, eps)
    b_ref:    (1, TO)   f32 bias tile
    o_ref:    (TB, TO)  output tile
    """
    sim = lax.dot_general(
        x_ref[...], w_ref[...],
        dimension_numbers=(((1,), (1,)), ((), ())),      # x @ w.T over D
        preferred_element_type=jnp.float32)              # (TB, TO) f32 accumulate
    # Scale the small result tile instead of re-normalizing the big operands.
    scaled = sim * xinv_ref[...] * winv_ref[...] + b_ref[...]
    o_ref[...] = scaled.astype(o_ref.dtype)


def _round_up(v, m):
    return ((v + m - 1) // m) * m


def _vmem_budget_bytes():
    """Per-TC VMEM budget with headroom; falls back to the v7x-safe value."""
    try:
        cap = int(pltpu.get_tpu_info().vmem_capacity_bytes)
    except Exception:
        cap = 64 * 1024 * 1024  # v7x per-TC VMEM (smallest across generations)
    return int(min(int(0.75 * cap), 100 * 1024 * 1024))


_VMEM_BUDGET = _vmem_budget_bytes()


@functools.partial(jax.jit, static_argnames=("block_b", "block_o"))
def cosine_classifier_with_bias(x, weight, bias, *, block_b=512, block_o=256):
    """x: (B, D), weight: (O, D), bias: (O,) -> (B, O)."""
    B, D = x.shape
    O, D2 = weight.shape
    assert D == D2, "feature dim mismatch"

    out_dtype = x.dtype
    eps = jnp.float32(1e-12)  # matches torch.nn.functional.normalize default

    # --- per-row inverse norms, computed ONCE outside the grid loop ----------
    # (tiny (B,1)/(1,O) f32 vectors; the raw x / W still go to the MXU)
    xf = x.astype(jnp.float32)
    wf = weight.astype(jnp.float32)
    x_ss = jnp.sum(xf * xf, axis=1, keepdims=True)                 # (B, 1)
    w_ss = jnp.sum(wf * wf, axis=1, keepdims=True)                 # (O, 1)
    x_inv = 1.0 / jnp.maximum(jnp.sqrt(x_ss), eps)                 # (B, 1)
    w_inv = (1.0 / jnp.maximum(jnp.sqrt(w_ss), eps)).reshape(1, O)  # (1, O)

    # --- tile sizes: sublane-aligned TB, lane-dense (x128) TO ---------------
    TB = min(block_b, _round_up(B, 8))
    TO = min(block_o, _round_up(O, 128))

    bx = jnp.dtype(x.dtype).itemsize
    bw = jnp.dtype(weight.dtype).itemsize
    bo = jnp.dtype(out_dtype).itemsize

    def footprint(tb, to):
        # double-buffered x/W/out blocks + the small f32 vectors
        return 2 * (tb * D * bx + to * D * bw + tb * to * bo + 4 * (tb + 2 * to))

    # Shrink tiles (keeping 8 / 128 alignment) if they would blow VMEM.
    while footprint(TB, TO) > _VMEM_BUDGET and TB > 64:
        TB = max(8, _round_up(TB // 2, 8))
    while footprint(TB, TO) > _VMEM_BUDGET and TO > 128:
        TO = max(128, _round_up(TO // 2, 128))
    # TODO(synk): for very large D on v7x, block the D axis with an f32
    # accumulator scratch instead of shrinking TB/TO further.

    B_pad = _round_up(B, TB)
    O_pad = _round_up(O, TO)

    # Zero padding is semantically safe: padded rows get x_inv/w_inv = 0 so
    # their outputs are exactly 0 and are sliced away below.
    x_p = x if B_pad == B else jnp.pad(x, ((0, B_pad - B), (0, 0)))
    w_p = weight if O_pad == O else jnp.pad(weight, ((0, O_pad - O), (0, 0)))
    xinv_p = x_inv if B_pad == B else jnp.pad(x_inv, ((0, B_pad - B), (0, 0)))
    winv_p = w_inv if O_pad == O else jnp.pad(w_inv, ((0, 0), (0, O_pad - O)))
    b_f32 = bias.astype(jnp.float32)
    b_p = (b_f32 if O_pad == O else jnp.pad(b_f32, (0, O_pad - O))).reshape(1, O_pad)

    grid = (B_pad // TB, O_pad // TO)

    vmem_limit = int(min(_VMEM_BUDGET, max(2 * footprint(TB, TO), 4 * 1024 * 1024)))

    out = pl.pallas_call(
        _cosine_kernel,
        out_shape=jax.ShapeDtypeStruct((B_pad, O_pad), out_dtype),
        grid_spec=pltpu.PrefetchScalarGridSpec(
            num_scalar_prefetch=0,
            grid=grid,
            in_specs=[
                pl.BlockSpec((TB, D), lambda i, j: (i, 0)),   # raw x tile
                pl.BlockSpec((TO, D), lambda i, j: (j, 0)),   # raw W tile
                pl.BlockSpec((TB, 1), lambda i, j: (i, 0)),   # x row inv-norms
                pl.BlockSpec((1, TO), lambda i, j: (0, j)),   # W row inv-norms
                pl.BlockSpec((1, TO), lambda i, j: (0, j)),   # bias
            ],
            out_specs=pl.BlockSpec((TB, TO), lambda i, j: (i, j)),
        ),
        compiler_params=pltpu.CompilerParams(
            # No cross-step scratch -> every output tile is independent, so
            # both grid axes can be sharded across cores (v7x 2-TC friendly
            # even when there is only one B tile).
            dimension_semantics=("parallel", "parallel"),
            vmem_limit_bytes=vmem_limit,
        ),
    )(x_p, w_p, xinv_p, winv_p, b_p)

    return out[:B, :O]


if __name__ == "__main__":
    # Small, module-consistent shapes: batch=8, input_dim=32, output_dim=16.
    B, D, O = 8, 32, 16

    key = jax.random.PRNGKey(0)
    kx, kw = jax.random.split(key)

    x = jax.random.normal(kx, (B, D), dtype=jnp.float32)
    # nn.Parameter(torch.randn(output_dim, input_dim)) -> standard normal init
    weight = jax.random.normal(kw, (O, D), dtype=jnp.float32)
    # nn.Parameter(torch.zeros(output_dim))
    bias = jnp.zeros((O,), dtype=jnp.float32)

    out = cosine_classifier_with_bias(x, weight, bias)
    out = jax.block_until_ready(out)

    # Pure-JAX reference (same math as the PyTorch forward).
    x_n = x / jnp.maximum(jnp.linalg.norm(x, axis=1, keepdims=True), 1e-12)
    w_n = weight / jnp.maximum(jnp.linalg.norm(weight, axis=1, keepdims=True), 1e-12)
    ref = x_n @ w_n.T + bias

    assert out.shape == (B, O)
    assert jnp.allclose(out, ref, atol=1e-5, rtol=1e-5), "mismatch vs reference"

    print("KERNEL_OK")
</pallas_src>

<mosaic_0001>
module attributes {stable_mosaic.version = 11 : i64} {
  func.func @_cosine_kernel(%arg0: i32, %arg1: i32, %arg2: memref<8x32xf32, #tpu.memory_space<vmem>>, %arg3: memref<128x32xf32, #tpu.memory_space<vmem>>, %arg4: memref<8x1xf32, #tpu.memory_space<vmem>>, %arg5: memref<1x128xf32, #tpu.memory_space<vmem>>, %arg6: memref<1x128xf32, #tpu.memory_space<vmem>>, %arg7: memref<8x128xf32, #tpu.memory_space<vmem>>) attributes {dimension_semantics = [#tpu.dimension_semantics<parallel>, #tpu.dimension_semantics<parallel>], iteration_bounds = array<i64: 1, 1>, scalar_prefetch = 0 : i64, scratch_operands = 0 : i64, tpu.core_type = #tpu.core_type<tc>, window_params = [{transform_indices = @transform_0, window_bounds = array<i64: 8, 32>}, {transform_indices = @transform_1, window_bounds = array<i64: 128, 32>}, {transform_indices = @transform_2, window_bounds = array<i64: 8, 1>}, {transform_indices = @transform_3, window_bounds = array<i64: 1, 128>}, {transform_indices = @transform_4, window_bounds = array<i64: 1, 128>}, {transform_indices = @transform_5, window_bounds = array<i64: 8, 128>}]} {
    %c0 = arith.constant 0 : index
    %c0_0 = arith.constant 0 : index
    %0 = vector.load %arg2[%c0, %c0_0] : memref<8x32xf32, #tpu.memory_space<vmem>>, vector<8x32xf32>
    %c0_1 = arith.constant 0 : index
    %c0_2 = arith.constant 0 : index
    %1 = vector.load %arg3[%c0_1, %c0_2] : memref<128x32xf32, #tpu.memory_space<vmem>>, vector<128x32xf32>
    %cst = arith.constant dense<0.000000e+00> : vector<8x128xf32>
    %2 = tpu.matmul %0, %1, %cst {dimension_numbers = #tpu.dot_dimension_numbers<[1], [1], [0], [0], [0, 0, 1, 0], [], []>} : vector<8x32xf32>, vector<128x32xf32>, vector<8x128xf32> -> vector<8x128xf32>
    %c0_3 = arith.constant 0 : index
    %c0_4 = arith.constant 0 : index
    %3 = vector.load %arg4[%c0_3, %c0_4] : memref<8x1xf32, #tpu.memory_space<vmem>>, vector<8x1xf32>
    %4 = vector.broadcast %3 : vector<8x1xf32> to vector<8x128xf32>
    %5 = arith.mulf %2, %4 : vector<8x128xf32>
    %c0_5 = arith.constant 0 : index
    %c0_6 = arith.constant 0 : index
    %6 = vector.load %arg5[%c0_5, %c0_6] : memref<1x128xf32, #tpu.memory_space<vmem>>, vector<1x128xf32>
    %7 = vector.broadcast %6 : vector<1x128xf32> to vector<8x128xf32>
    %8 = arith.mulf %5, %7 : vector<8x128xf32>
    %c0_7 = arith.constant 0 : index
    %c0_8 = arith.constant 0 : index
    %9 = vector.load %arg6[%c0_7, %c0_8] : memref<1x128xf32, #tpu.memory_space<vmem>>, vector<1x128xf32>
    %10 = vector.broadcast %9 : vector<1x128xf32> to vector<8x128xf32>
    %11 = arith.addf %8, %10 : vector<8x128xf32>
    %c0_9 = arith.constant 0 : index
    %c0_10 = arith.constant 0 : index
    %12 = vector.load %arg7[%c0_9, %c0_10] : memref<8x128xf32, #tpu.memory_space<vmem>>, vector<8x128xf32>
    tpu.vector_store %arg7[%c0_9, %c0_10], %11 {strides = array<i32>} : memref<8x128xf32, #tpu.memory_space<vmem>>, vector<8x128xf32>,
    return
  }
  func.func @transform_0(%arg0: i32, %arg1: i32) -> (i32, i32) {
    %c0_i32 = arith.constant 0 : i32
    %c0_i32_0 = arith.constant 0 : i32
    return %arg0, %c0_i32 : i32, i32
  }
  func.func @transform_1(%arg0: i32, %arg1: i32) -> (i32, i32) {
    %c0_i32 = arith.constant 0 : i32
    %c0_i32_0 = arith.constant 0 : i32
    return %arg1, %c0_i32 : i32, i32
  }
  func.func @transform_2(%arg0: i32, %arg1: i32) -> (i32, i32) {
    %c0_i32 = arith.constant 0 : i32
    %c0_i32_0 = arith.constant 0 : i32
    return %arg0, %c0_i32 : i32, i32
  }
  func.func @transform_3(%arg0: i32, %arg1: i32) -> (i32, i32) {
    %c0_i32 = arith.constant 0 : i32
    %c0_i32_0 = arith.constant 0 : i32
    return %c0_i32, %arg1 : i32, i32
  }
  func.func @transform_4(%arg0: i32, %arg1: i32) -> (i32, i32) {
    %c0_i32 = arith.constant 0 : i32
    %c0_i32_0 = arith.constant 0 : i32
    return %c0_i32, %arg1 : i32, i32
  }
  func.func @transform_5(%arg0: i32, %arg1: i32) -> (i32, i32) {
    %c0_i32 = arith.constant 0 : i32
    return %arg0, %arg1 : i32, i32
  }
}

</mosaic_0001>

<llo_original>
// kernel: cosine_classifier_with_bias.1
$region0: #{cosine_classifier_with_bias.1}
  #allocation0 [shape = 'u32[]', space=smem, size = 0x4, offset = 0x4, fixed_abs, tag = 'smem constant byte address 0x4 - core index']
  #allocation1 [shape = 'u32[144,128]{1,0:T(1,128)}', space=vmem, size = 0x12000, scoped, tag = 'internal scratch']
  %s0 = inlined_call_operand.vmem [shape: f32[8,32], index: 0, kind: input, shape index: {}]
  %s1 = inlined_call_operand.vmem [shape: f32[128,32], index: 1, kind: input, shape index: {}]
  %s2 = inlined_call_operand.vmem [shape: f32[8,1], index: 2, kind: input, shape index: {}]
  %s3 = inlined_call_operand.vmem [shape: f32[1,128], index: 3, kind: input, shape index: {}]
  %s4 = inlined_call_operand.vmem [shape: f32[1,128], index: 4, kind: input, shape index: {}]
  %s5 = inlined_call_operand.hbm [shape: f32[8,128], index: 5, kind: output, shape index: {}]
  %s6 = sld [smem:[#allocation0]]
  $region30: #{cosine_classifier_with_bias.1} parent=0
    _
  %s8 = ssub.s32 1, %s6
  %s9 = scalar_select 0, %s8, %s6
  $region1: #{cosine_classifier_with_bias.1} parent=0
    #allocation2 [shape = 'u8[4096]{0}', space=vmem, size = 0x1000, scoped, tag = 'output window, operand 0, single buffered']
    #allocation3 [shape = 's32[1]{0}', space=sflag, size = 0x4, scoped, tag = 'scoped memory for cosine_classifier_with_bias.1']
    %10 = vsyncpa [#allocation3], 0
    // Predicated region
    $region2: #{cosine_classifier_with_bias.1} parent=1 // pred_check
      _
    $region3: #{cosine_classifier_with_bias.1} parent=1 // pred_check_branch
      %12 = sbr.rel (0) target = $region5
    $region4: #{cosine_classifier_with_bias.1} parent=1 // pred_region
      _
    $region5: #{cosine_classifier_with_bias.1} parent=1 // pred_fallthru
      _
    // Predicated region
    $region6: #{cosine_classifier_with_bias.1} parent=1 // pred_check
      _
    $region7: #{cosine_classifier_with_bias.1} parent=1 // pred_check_branch
      %14 = sbr.rel (0) target = $region9
    $region8: #{cosine_classifier_with_bias.1} parent=1 // pred_region
      _
    $region9: #{cosine_classifier_with_bias.1} parent=1 // pred_fallthru
      _
    // Predicated region
    $region10: #{cosine_classifier_with_bias.1} parent=1 // pred_check
      _
    $region11: #{cosine_classifier_with_bias.1} parent=1 // pred_check_branch
      %16 = sbr.rel (0) target = $region13
    $region12: #{cosine_classifier_with_bias.1} parent=1 // pred_region
      _
    $region13: #{cosine_classifier_with_bias.1} parent=1 // pred_fallthru
      _
    // Predicated region
    $region14: #{cosine_classifier_with_bias.1} parent=1 // pred_check
      _
    $region15: #{cosine_classifier_with_bias.1} parent=1 // pred_check_branch
      %18 = sbr.rel (0) target = $region17
    $region16: #{cosine_classifier_with_bias.1} parent=1 // pred_region
      _
    $region17: #{cosine_classifier_with_bias.1} parent=1 // pred_fallthru
      _
    // Predicated region
    $region18: #{cosine_classifier_with_bias.1} parent=1 // pred_check
      _
    $region19: #{cosine_classifier_with_bias.1} parent=1 // pred_check_branch
      %20 = sbr.rel (0) target = $region21
    $region20: #{cosine_classifier_with_bias.1} parent=1 // pred_region
      _
    $region21: #{cosine_classifier_with_bias.1} parent=1 // pred_fallthru
      _
    %v21 = vld [vmem:[%s0] sm:$0xff]
    %v22 = vld [vmem:[%s1] sm:$0xff]
    %v23 = vld [vmem:[%s1 + $0x8] sm:$0xff]
    %v24 = vld [vmem:[%s1 + $0x10] sm:$0xff]
    %v25 = vld [vmem:[%s1 + $0x18] sm:$0xff]
    %v26 = vld [vmem:[%s1 + $0x20] sm:$0xff]
    %v27 = vld [vmem:[%s1 + $0x28] sm:$0xff]
    %v28 = vld [vmem:[%s1 + $0x30] sm:$0xff]
    %v29 = vld [vmem:[%s1 + $0x38] sm:$0xff]
    %v30 = vld [vmem:[%s1 + $0x40] sm:$0xff]
    %v31 = vld [vmem:[%s1 + $0x48] sm:$0xff]
    %v32 = vld [vmem:[%s1 + $0x50] sm:$0xff]
    %v33 = vld [vmem:[%s1 + $0x58] sm:$0xff]
    %v34 = vld [vmem:[%s1 + $0x60] sm:$0xff]
    %v35 = vld [vmem:[%s1 + $0x68] sm:$0xff]
    %v36 = vld [vmem:[%s1 + $0x70] sm:$0xff]
    %v37 = vld [vmem:[%s1 + $0x78] sm:$0xff]
    %vm38 = vcmask 261120
    %v40 = vsel %vm38, %v21, 0
    %v43 = vsel %vm38, %v22, 0
    %v46 = vsel %vm38, %v23, 0
    %v49 = vsel %vm38, %v24, 0
    %v52 = vsel %vm38, %v25, 0
    %v55 = vsel %vm38, %v26, 0
    %v58 = vsel %vm38, %v27, 0
    %v61 = vsel %vm38, %v28, 0
    %v64 = vsel %vm38, %v29, 0
    %v67 = vsel %vm38, %v30, 0
    %v70 = vsel %vm38, %v31, 0
    %v73 = vsel %vm38, %v32, 0
    %v76 = vsel %vm38, %v33, 0
    %v79 = vsel %vm38, %v34, 0
    %v82 = vsel %vm38, %v35, 0
    %v85 = vsel %vm38, %v36, 0
    %v88 = vsel %vm38, %v37, 0
    %90 = vmatprep.subr.mxu0 0.0
    %91 = vmatpush1.xpose.msra.mxu0 %v88
    %92 = vmatprep.subr.mxu0 0.0
    %93 = vmatpush1.xpose.msra.mxu0 %v85
    %94 = vmatprep.subr.mxu0 0.0
    %95 = vmatpush1.xpose.msra.mxu0 %v82
    %96 = vmatprep.subr.mxu0 0.0
    %97 = vmatpush1.xpose.msra.mxu0 %v79
    %98 = vmatprep.subr.mxu0 0.0
    %99 = vmatpush1.xpose.msra.mxu0 %v76
    %100 = vmatprep.subr.mxu0 0.0
    %101 = vmatpush1.xpose.msra.mxu0 %v73
    %102 = vmatprep.subr.mxu0 0.0
    %103 = vmatpush1.xpose.msra.mxu0 %v70
    %104 = vmatprep.subr.mxu0 0.0
    %105 = vmatpush1.xpose.msra.mxu0 %v67
    %106 = vmatprep.subr.mxu0 0.0
    %107 = vmatpush1.xpose.msra.mxu0 %v64
    %108 = vmatprep.subr.mxu0 0.0
    %109 = vmatpush1.xpose.msra.mxu0 %v61
    %110 = vmatprep.subr.mxu0 0.0
    %111 = vmatpush1.xpose.msra.mxu0 %v58
    %112 = vmatprep.subr.mxu0 0.0
    %113 = vmatpush1.xpose.msra.mxu0 %v55
    %114 = vmatprep.subr.mxu0 0.0
    %115 = vmatpush1.xpose.msra.mxu0 %v52
    %116 = vmatprep.subr.mxu0 0.0
    %117 = vmatpush1.xpose.msra.mxu0 %v49
    %118 = vmatprep.subr.mxu0 0.0
    %119 = vmatpush1.xpose.msra.mxu0 %v46
    %120 = vmatprep.subr.mxu0 0.0
    %121 = vmatpush1.xpose.msra.mxu0 %v43
    %122 = vmatprep.subr.mxu0 0.0
    %123 = vmatpush2.xpose.msra.mxu0 0.0
    %124 = vmatprep.subr.mxu0 0.0
    %125 = vmatpush2.xpose.msra.mxu0 0.0
    %126 = vmatprep.subr.mxu0 0.0
    %127 = vmatpush2.xpose.msra.mxu0 0.0
    %128 = vmatprep.subr.mxu0 0.0
    %129 = vmatpush2.xpose.msra.mxu0 0.0
    %130 = vmatprep.subr.mxu0 0.0
    %131 = vmatpush2.xpose.msra.mxu0 0.0
    %132 = vmatprep.subr.mxu0 0.0
    %133 = vmatpush2.xpose.msra.mxu0 0.0
    %134 = vmatprep.subr.mxu0 0.0
    %135 = vmatpush2.xpose.msra.mxu0 0.0
    %136 = vmatprep.subr.mxu0 0.0
    %137 = vmatpush2.xpose.msra.mxu0 0.0
    %138 = vmatprep.subr.mxu0 0.0
    %139 = vmatpush2.xpose.msra.mxu0 0.0
    %140 = vmatprep.subr.mxu0 0.0
    %141 = vmatpush2.xpose.msra.mxu0 0.0
    %142 = vmatprep.subr.mxu0 0.0
    %143 = vmatpush2.xpose.msra.mxu0 0.0
    %144 = vmatprep.subr.mxu0 0.0
    %145 = vmatpush2.xpose.msra.mxu0 0.0
    %146 = vmatprep.subr.mxu0 0.0
    %147 = vmatpush2.xpose.msra.mxu0 0.0
    %148 = vmatprep.subr.mxu0 0.0
    %149 = vmatpush2.xpose.msra.mxu0 0.0
    %150 = vmatprep.subr.mxu0 0.0
    %151 = vmatpush2.xpose.msra.mxu0 0.0
    %152 = vmatprep.subr.mxu0 0.0
    %153 = vmatpush2.xpose.msra.mxu0 0.0
    %154 = vmatprep.mubr.f32.mxu0 0.0
    %155 = vmatmul.mubr.f32.gmra.mxu0 %v40
    %v156 = vpop.f32.mrf.mxu0
    %v157 = vadd.f32 0.0, %v156
    %v158 = vpop.f32.mrf.mxu0
    %159 = vdwg.mxu0
    %v160 = vld [vmem:[%s2] sm:$0xff]
    %162 = vset.pattern.permute.xlu0 0
    %163 = vperm.xlu0 %162, %v160
    %v164 = vpop.permute.xlu0 %163
    %v166 = vmul.f32 %v157, %v164
    %v167 = vld [vmem:[%s3] sm:$0x1]
    %v169 = vlaneseq
    %v170 = vshrl.u32 %v169, 7
    %v171 = vsub.s32 0, %v170
    %v172 = vrot.slane %v167, %v171
    %v174 = vmul.f32 %v166, %v172
    %v175 = vld [vmem:[%s4] sm:$0x1]
    %v177 = vlaneseq
    %v178 = vshrl.u32 %v177, 7
    %v179 = vsub.s32 0, %v178
    %v180 = vrot.slane %v175, %v179
    %v182 = vadd.f32 %v174, %v180
    %183 = vst [vmem:[#allocation2] sm:$0xff] %v182
    // Predicated region
    $region22: #{cosine_classifier_with_bias.1} parent=1 // pred_check
      _
    $region23: #{cosine_classifier_with_bias.1} parent=1 // pred_check_branch
      %185 = sbr.rel (0) target = $region25
    $region24: #{cosine_classifier_with_bias.1} parent=1 // pred_region
      %s187 = ssub.s32 128, 128
      %188 = vsyncadd [#allocation3], %s187
      %s190 = sshll.u32 [#allocation2], 4
      %s191 = int_to_ptr.vmem [resolvable:$true] %s190
      %193 = dma.vmem_to_hbm [thread:$0]  %s191, 128, %s5, [#allocation3]
    $region25: #{cosine_classifier_with_bias.1} parent=1 // pred_fallthru
      _
    // Predicated region
    $region26: #{cosine_classifier_with_bias.1} parent=1 // pred_check
      _
    $region27: #{cosine_classifier_with_bias.1} parent=1 // pred_check_branch
      %195 = sbr.rel (0) target = $region29
    $region28: #{cosine_classifier_with_bias.1} parent=1 // pred_region
      %196 = dma.done [#allocation3], 128
    $region29: #{cosine_classifier_with_bias.1} parent=1 // pred_fallthru
      _
    %197 = vsyncpa [#allocation3], 1

</llo_original>
